<compile_context>
chip_gen: v5e
topology: v5e:2x2
jax: 0.10.0
libtpu: 0.0.40
codegen_flags: <defaults>
</compile_context>

<pallas_src>
import jax
import jax.numpy as jnp
from jax.experimental import pallas as pl
from jax.experimental.pallas import tpu as pltpu


_LANE = 128      # lane width -> last-dim alignment
_SUBLANE = 8     # sublane width -> second-to-last-dim alignment


def _round_up(n, m):
    return ((n + m - 1) // m) * m


def _mlp_kernel(x_ref, w1_ref, b1_ref, w2_ref, b2_ref, out_ref):
    """Fused Linear -> ReLU -> Dropout(eval=identity) -> Linear -> Sigmoid."""
    # Cast the streamed x tile to the weight dtype in-register (no wrapper copy).
    x = x_ref[...].astype(w1_ref.dtype)
    # Layer 1 on the MXU, f32 accumulation; bias add + ReLU on full 128-lane tiles.
    h = jnp.dot(x, w1_ref[...], preferred_element_type=jnp.float32) + b1_ref[...]
    h = jnp.maximum(h, 0.0)                                   # ReLU
    # Dropout(p=0.1) in eval mode == identity.
    # TODO(synk): training-mode dropout would need pltpu.prng_seed/prng_random_bits + 1/(1-p) rescale.
    o = jnp.dot(h.astype(w2_ref.dtype), w2_ref[...],
                preferred_element_type=jnp.float32) + b2_ref[...]
    # Exact sigmoid: exp runs on the EUP; the epilogue is nowhere near the
    # bottleneck (kernel is HBM/DMA-bound), so exact costs nothing.
    out_ref[...] = (1.0 / (1.0 + jnp.exp(-o))).astype(out_ref.dtype)


def prepare_params(w1, b1, w2, b2, *, param_dtype=jnp.bfloat16):
    """Pad feature dims to multiples of 128 and cast weights ONCE.

    Call at module-init time and reuse the result for every forward call
    (rebuilding per call would double weight HBM traffic at small batch).

    w1: (in_features, hidden)   b1: (hidden,)
    w2: (hidden, out_features)  b2: (out_features,)
    Weights are stored (in, out): the kernel computes x @ W, the transpose of
    PyTorch's (out, in) storage.

    Padded w1 columns / b1 entries produce h == relu(0) == 0 and the padded w2
    rows are zero, so the padded math is identical to the unpadded math;
    padded output columns are sliced off in the wrapper.
    """
    in_f, hid = w1.shape
    out_f = w2.shape[1]
    in_p, hid_p, out_p = (_round_up(d, _LANE) for d in (in_f, hid, out_f))

    w1p = jnp.zeros((in_p, hid_p), param_dtype).at[:in_f, :hid].set(
        w1.astype(param_dtype))
    b1p = jnp.zeros((1, hid_p), jnp.float32).at[:, :hid].set(
        b1.reshape(1, -1).astype(jnp.float32))
    w2p = jnp.zeros((hid_p, out_p), param_dtype).at[:hid, :out_f].set(
        w2.astype(param_dtype))
    b2p = jnp.zeros((1, out_p), jnp.float32).at[:, :out_f].set(
        b2.reshape(1, -1).astype(jnp.float32))
    return (w1p, b1p, w2p, b2p), (in_f, hid, out_f)


def perceptron_forward(x, params, dims, *, block_batch=512):
    """Forward pass of CIFAR100PredictorPerceptron (eval mode).

    x      : (B, C, H, W) float32 (flattened internally like torch.flatten(x, 1))
    params : output of prepare_params (pre-padded / pre-cast, built once)
    dims   : (in_features, hidden, out_features) logical sizes
    Returns (B, out_features) float32.
    """
    w1p, b1p, w2p, b2p = params
    in_f, _, out_f = dims
    in_p, hid_p = w1p.shape
    out_p = w2p.shape[1]

    B = x.shape[0]
    x2d = x.reshape(B, -1)
    if x2d.shape[1] != in_f:
        raise ValueError(f"flattened input has {x2d.shape[1]} features, expected {in_f}")
    if in_f != in_p:
        # Rare path: only lane-pad x when in_features isn't 128-aligned.
        x2d = jnp.zeros((B, in_p), x2d.dtype).at[:, :in_f].set(x2d)

    # Batch tiling.  No batch padding copy: if B doesn't divide by the tile,
    # the final tile is ragged and Pallas masks its out-of-bounds rows (safe:
    # no cross-row ops).  For small B the block spans the full batch dim,
    # which satisfies the (8,128) tiling rule; otherwise tm is sublane-aligned.
    tm = B if B <= block_batch else _round_up(block_batch, _SUBLANE)
    grid = (pl.cdiv(B, tm),)

    resident = lambda i: (0, 0)   # constant index_map -> block stays VMEM-resident

    x_bytes = x2d.dtype.itemsize
    w_bytes = w1p.dtype.itemsize
    cost = pl.CostEstimate(
        flops=2 * B * (in_p * hid_p + hid_p * out_p),
        transcendentals=B * out_p,                           # one exp per output elem
        bytes_accessed=B * in_p * x_bytes                    # x streamed once
        + (in_p * hid_p + hid_p * out_p) * w_bytes           # weights read once
        + (hid_p + out_p) * 4                                # biases
        + B * out_p * 4,                                     # output
    )

    # VMEM budget: x + out tiles double-buffered, weights single-buffered
    # (pl.Buffered(1) below).  Only raise the scoped limit when the default
    # (16 MiB on v5e, 32 MiB on v6e/v7x) would be tight.
    vmem_need = (2 * tm * in_p * x_bytes + 2 * tm * out_p * 4
                 + (in_p * hid_p + hid_p * out_p) * w_bytes
                 + (hid_p + out_p) * 4)
    vmem_limit = int(vmem_need * 1.25) + (1 << 20) if vmem_need > (12 << 20) else None

    out_padded = pl.pallas_call(
        _mlp_kernel,
        out_shape=jax.ShapeDtypeStruct((B, out_p), jnp.float32),
        grid=grid,
        in_specs=[
            pl.BlockSpec((tm, in_p), lambda i: (i, 0)),       # x: streamed per tile
            pl.BlockSpec((in_p, hid_p), resident, pipeline_mode=pl.Buffered(1)),  # w1
            pl.BlockSpec((1, hid_p), resident, pipeline_mode=pl.Buffered(1)),     # b1
            pl.BlockSpec((hid_p, out_p), resident, pipeline_mode=pl.Buffered(1)), # w2
            pl.BlockSpec((1, out_p), resident, pipeline_mode=pl.Buffered(1)),     # b2
        ],
        out_specs=pl.BlockSpec((tm, out_p), lambda i: (i, 0)),
        compiler_params=pltpu.CompilerParams(
            dimension_semantics=("parallel",),   # megacore sharding once grid >= 2 tiles
            vmem_limit_bytes=vmem_limit),
        cost_estimate=cost,
    )(x2d, w1p, b1p, w2p, b2p)

    return out_padded[:, :out_f]


def _init_linear_params(key, fan_in, fan_out):
    """Deterministic init mimicking torch.nn.Linear: U(-1/sqrt(fan_in), +...)."""
    kw, kb = jax.random.split(key)
    bound = 1.0 / (fan_in ** 0.5)
    # stored as (in, out) so the kernel computes x @ W
    w = jax.random.uniform(kw, (fan_in, fan_out), jnp.float32, -bound, bound)
    b = jax.random.uniform(kb, (fan_out,), jnp.float32, -bound, bound)
    return w, b


if __name__ == "__main__":
    key = jax.random.PRNGKey(0)
    k_x, k_l1, k_l2 = jax.random.split(key, 3)

    # Small shapes consistent with the module's forward:
    batch, C, H, W = 2, 4, 16, 16
    input_size = C * H * W          # 1024 after flatten
    hidden_size = 32
    output_size = 100               # CIFAR-100 classes

    x = jax.random.normal(k_x, (batch, C, H, W), jnp.float32)
    w1, b1 = _init_linear_params(k_l1, input_size, hidden_size)
    w2, b2 = _init_linear_params(k_l2, hidden_size, output_size)

    # Pad + cast the weights ONCE (module-init time), reuse every forward call.
    params, dims = prepare_params(w1, b1, w2, b2, param_dtype=jnp.bfloat16)

    out = perceptron_forward(x, params, dims)
    out = jax.block_until_ready(out)
    assert out.shape == (batch, output_size)

    x2d = x.reshape(batch, -1)

    # Reference 1: mirrors the kernel's mixed precision exactly
    # (bf16 MXU inputs, f32 accumulation, exact sigmoid) -> tight tolerance.
    w1b, w2b = w1.astype(jnp.bfloat16), w2.astype(jnp.bfloat16)
    h = jnp.dot(x2d.astype(jnp.bfloat16), w1b, preferred_element_type=jnp.float32) + b1
    h = jnp.maximum(h, 0.0)
    o = jnp.dot(h.astype(jnp.bfloat16), w2b, preferred_element_type=jnp.float32) + b2
    ref_mixed = 1.0 / (1.0 + jnp.exp(-o))
    assert jnp.allclose(out, ref_mixed, atol=5e-4, rtol=5e-4), \
        float(jnp.max(jnp.abs(out - ref_mixed)))

    # Reference 2: full-f32 PyTorch-equivalent math; looser tolerance covers
    # the bf16 weight / hidden-activation quantization.
    ref_f32 = jax.nn.sigmoid(jnp.maximum(x2d @ w1 + b1, 0.0) @ w2 + b2)
    assert jnp.allclose(out, ref_f32, atol=3e-2, rtol=3e-2), \
        float(jnp.max(jnp.abs(out - ref_f32)))

    print("KERNEL_OK")
</pallas_src>

<mosaic_0001>
module attributes {stable_mosaic.version = 11 : i64} {
  func.func @_mlp_kernel(%arg0: i32, %arg1: memref<2x1024xf32, #tpu.memory_space<vmem>>, %arg2: memref<1024x128xbf16, #tpu.memory_space<vmem>>, %arg3: memref<1x128xf32, #tpu.memory_space<vmem>>, %arg4: memref<128x128xbf16, #tpu.memory_space<vmem>>, %arg5: memref<1x128xf32, #tpu.memory_space<vmem>>, %arg6: memref<2x128xf32, #tpu.memory_space<vmem>>) attributes {dimension_semantics = [#tpu.dimension_semantics<parallel>], iteration_bounds = array<i64: 1>, scalar_prefetch = 0 : i64, scratch_operands = 0 : i64, tpu.core_type = #tpu.core_type<tc>, window_params = [{transform_indices = @transform_0, window_bounds = array<i64: 2, 1024>}, {pipeline_mode = #tpu.pipeline_mode<synchronous>, transform_indices = @transform_1, window_bounds = array<i64: 1024, 128>}, {pipeline_mode = #tpu.pipeline_mode<synchronous>, transform_indices = @transform_2, window_bounds = array<i64: 1, 128>}, {pipeline_mode = #tpu.pipeline_mode<synchronous>, transform_indices = @transform_3, window_bounds = array<i64: 128, 128>}, {pipeline_mode = #tpu.pipeline_mode<synchronous>, transform_indices = @transform_4, window_bounds = array<i64: 1, 128>}, {transform_indices = @transform_5, window_bounds = array<i64: 2, 128>}]} {
    %c0 = arith.constant 0 : index
    %c0_0 = arith.constant 0 : index
    %0 = vector.load %arg1[%c0, %c0_0] : memref<2x1024xf32, #tpu.memory_space<vmem>>, vector<2x1024xf32>
    %1 = arith.truncf %0 : vector<2x1024xf32> to vector<2x1024xbf16>
    %c0_1 = arith.constant 0 : index
    %c0_2 = arith.constant 0 : index
    %2 = vector.load %arg2[%c0_1, %c0_2] : memref<1024x128xbf16, #tpu.memory_space<vmem>>, vector<1024x128xbf16>
    %cst = arith.constant dense<0.000000e+00> : vector<2x128xf32>
    %3 = tpu.matmul %1, %2, %cst {dimension_numbers = #tpu.dot_dimension_numbers<[1], [0], [0], [1], [0, 0, 1, 1], [], []>} : vector<2x1024xbf16>, vector<1024x128xbf16>, vector<2x128xf32> -> vector<2x128xf32>
    %c0_3 = arith.constant 0 : index
    %c0_4 = arith.constant 0 : index
    %4 = vector.load %arg3[%c0_3, %c0_4] : memref<1x128xf32, #tpu.memory_space<vmem>>, vector<1x128xf32>
    %5 = vector.broadcast %4 : vector<1x128xf32> to vector<2x128xf32>
    %6 = arith.addf %3, %5 : vector<2x128xf32>
    %cst_5 = arith.constant 0.000000e+00 : f32
    %7 = vector.broadcast %cst_5 : f32 to vector<2x128xf32>
    %8 = arith.maximumf %6, %7 : vector<2x128xf32>
    %9 = arith.truncf %8 : vector<2x128xf32> to vector<2x128xbf16>
    %c0_6 = arith.constant 0 : index
    %c0_7 = arith.constant 0 : index
    %10 = vector.load %arg4[%c0_6, %c0_7] : memref<128x128xbf16, #tpu.memory_space<vmem>>, vector<128x128xbf16>
    %cst_8 = arith.constant dense<0.000000e+00> : vector<2x128xf32>
    %11 = tpu.matmul %9, %10, %cst_8 {dimension_numbers = #tpu.dot_dimension_numbers<[1], [0], [0], [1], [0, 0, 1, 1], [], []>} : vector<2x128xbf16>, vector<128x128xbf16>, vector<2x128xf32> -> vector<2x128xf32>
    %c0_9 = arith.constant 0 : index
    %c0_10 = arith.constant 0 : index
    %12 = vector.load %arg5[%c0_9, %c0_10] : memref<1x128xf32, #tpu.memory_space<vmem>>, vector<1x128xf32>
    %13 = vector.broadcast %12 : vector<1x128xf32> to vector<2x128xf32>
    %14 = arith.addf %11, %13 : vector<2x128xf32>
    %cst_11 = arith.constant 0.000000e+00 : f32
    %15 = vector.broadcast %cst_11 : f32 to vector<2x128xf32>
    %16 = arith.subf %15, %14 : vector<2x128xf32>
    %17 = math.exp %16 : vector<2x128xf32>
    %cst_12 = arith.constant 1.000000e+00 : f32
    %18 = vector.broadcast %cst_12 : f32 to vector<2x128xf32>
    %19 = arith.addf %18, %17 : vector<2x128xf32>
    %cst_13 = arith.constant 1.000000e+00 : f32
    %20 = vector.broadcast %cst_13 : f32 to vector<2x128xf32>
    %21 = arith.divf %20, %19 : vector<2x128xf32>
    %c0_14 = arith.constant 0 : index
    %c0_15 = arith.constant 0 : index
    %22 = vector.load %arg6[%c0_14, %c0_15] : memref<2x128xf32, #tpu.memory_space<vmem>>, vector<2x128xf32>
    tpu.vector_store %arg6[%c0_14, %c0_15], %21 {strides = array<i32>} : memref<2x128xf32, #tpu.memory_space<vmem>>, vector<2x128xf32>,
    return
  }
  func.func @transform_0(%arg0: i32) -> (i32, i32) {
    %c0_i32 = arith.constant 0 : i32
    %c0_i32_0 = arith.constant 0 : i32
    return %arg0, %c0_i32 : i32, i32
  }
  func.func @transform_1(%arg0: i32) -> (i32, i32) {
    %c0_i32 = arith.constant 0 : i32
    %c0_i32_0 = arith.constant 0 : i32
    %c0_i32_1 = arith.constant 0 : i32
    return %c0_i32, %c0_i32_0 : i32, i32
  }
  func.func @transform_2(%arg0: i32) -> (i32, i32) {
    %c0_i32 = arith.constant 0 : i32
    %c0_i32_0 = arith.constant 0 : i32
    %c0_i32_1 = arith.constant 0 : i32
    return %c0_i32, %c0_i32_0 : i32, i32
  }
  func.func @transform_3(%arg0: i32) -> (i32, i32) {
    %c0_i32 = arith.constant 0 : i32
    %c0_i32_0 = arith.constant 0 : i32
    %c0_i32_1 = arith.constant 0 : i32
    return %c0_i32, %c0_i32_0 : i32, i32
  }
  func.func @transform_4(%arg0: i32) -> (i32, i32) {
    %c0_i32 = arith.constant 0 : i32
    %c0_i32_0 = arith.constant 0 : i32
    %c0_i32_1 = arith.constant 0 : i32
    return %c0_i32, %c0_i32_0 : i32, i32
  }
  func.func @transform_5(%arg0: i32) -> (i32, i32) {
    %c0_i32 = arith.constant 0 : i32
    %c0_i32_0 = arith.constant 0 : i32
    return %arg0, %c0_i32 : i32, i32
  }
}

</mosaic_0001>

<llo_original>
// kernel: tpu_custom_call.1
$region0: #{tpu_custom_call.1}
  #allocation0 [shape = 'u32[]', space=smem, size = 0x4, offset = 0x4, fixed_abs, tag = 'smem constant byte address 0x4 - core index']
  #allocation1 [shape = 'u32[72,128]{1,0:T(1,128)}', space=vmem, size = 0x9000, scoped, tag = 'internal scratch']
  %s0 = inlined_call_operand.hbm [shape: f32[2,1024], index: 0, kind: input, shape index: {}]
  %s1 = inlined_call_operand.hbm [shape: bf16[1024,128], index: 1, kind: input, shape index: {}]
  %s2 = inlined_call_operand.vmem [shape: f32[1,128], index: 2, kind: input, shape index: {}]
  %s3 = inlined_call_operand.hbm [shape: bf16[128,128], index: 3, kind: input, shape index: {}]
  %s4 = inlined_call_operand.vmem [shape: f32[1,128], index: 4, kind: input, shape index: {}]
  %s5 = inlined_call_operand.hbm [shape: f32[2,128], index: 5, kind: output, shape index: {}]
  %s6 = sld [smem:[#allocation0]]
  $region42: #{tpu_custom_call.1} parent=0
    _
  %s8 = ssub.s32 1, %s6
  %s9 = scalar_select 0, %s8, %s6
  $region1: #{tpu_custom_call.1} parent=0
    #allocation2 [shape = 'u8[8192]{0}', space=vmem, size = 0x2000, scoped, tag = 'input window, operand 0, single buffered']
    #allocation3 [shape = 's32[1]{0}', space=sflag, size = 0x4, scoped, tag = 'scoped memory for tpu_custom_call.1']
    #allocation4 [shape = 's32[1]{0}', space=sflag, size = 0x4, scoped, tag = 'scoped memory for tpu_custom_call.1']
    #allocation5 [shape = 'u8[262144]{0}', space=vmem, size = 0x40000, scoped, tag = 'input window, operand 1, single buffered']
    #allocation6 [shape = 's32[1]{0}', space=sflag, size = 0x4, scoped, tag = 'scoped memory for tpu_custom_call.1']
    #allocation7 [shape = 'u8[32768]{0}', space=vmem, size = 0x8000, scoped, tag = 'input window, operand 3, single buffered']
    #allocation8 [shape = 'u8[1024]{0}', space=vmem, size = 0x400, scoped, tag = 'output window, operand 0, single buffered']
    %10 = vsyncpa [#allocation3], 0
    %11 = vsyncpa [#allocation6], 0
    %12 = vsyncpa [#allocation4], 0
    // Predicated region
    $region2: #{tpu_custom_call.1} parent=1 // pred_check
      _
    $region3: #{tpu_custom_call.1} parent=1 // pred_check_branch
      %14 = sbr.rel (0) target = $region5
    $region4: #{tpu_custom_call.1} parent=1 // pred_region
      %16 = vsyncadd [#allocation3], 0
      %s18 = sshll.u32 %s0, 4
      %s19 = int_to_ptr.hbm [resolvable:$true] %s18
      %s20 = sshll.u32 [#allocation2], 4
      %s21 = int_to_ptr.vmem [resolvable:$true] %s20
      %23 = dma.hbm_to_vmem [thread:$0]  %s19, 256, %s21, [#allocation3]
    $region5: #{tpu_custom_call.1} parent=1 // pred_fallthru
      _
    // Predicated region
    $region6: #{tpu_custom_call.1} parent=1 // pred_check
      _
    $region7: #{tpu_custom_call.1} parent=1 // pred_check_branch
      %25 = sbr.rel (0) target = $region9
    $region8: #{tpu_custom_call.1} parent=1 // pred_region
      %27 = vsyncadd [#allocation6], 0
      %s28 = sshll.u32 %s1, 4
      %s29 = int_to_ptr.hbm [resolvable:$true] %s28
      %s30 = sshll.u32 [#allocation5], 4
      %s31 = int_to_ptr.vmem [resolvable:$true] %s30
      %36 = dma.hbm_to_vmem [thread:$0]  %s29, 8192, %s31, [#allocation6], 64, 64, 4
    $region9: #{tpu_custom_call.1} parent=1 // pred_fallthru
      _
    // Predicated region
    $region10: #{tpu_custom_call.1} parent=1 // pred_check
      _
    $region11: #{tpu_custom_call.1} parent=1 // pred_check_branch
      %38 = sbr.rel (0) target = $region13
    $region12: #{tpu_custom_call.1} parent=1 // pred_region
      _
    $region13: #{tpu_custom_call.1} parent=1 // pred_fallthru
      _
    // Predicated region
    $region14: #{tpu_custom_call.1} parent=1 // pred_check
      _
    $region15: #{tpu_custom_call.1} parent=1 // pred_check_branch
      %40 = sbr.rel (0) target = $region17
    $region16: #{tpu_custom_call.1} parent=1 // pred_region
      %42 = vsyncadd [#allocation6], 0
      %s43 = sshll.u32 %s3, 4
      %s44 = int_to_ptr.hbm [resolvable:$true] %s43
      %s45 = sshll.u32 [#allocation7], 4
      %s46 = int_to_ptr.vmem [resolvable:$true] %s45
      %51 = dma.hbm_to_vmem [thread:$0]  %s44, 1024, %s46, [#allocation6], 64, 64, 4
    $region17: #{tpu_custom_call.1} parent=1 // pred_fallthru
      _
    // Predicated region
    $region18: #{tpu_custom_call.1} parent=1 // pred_check
      _
    $region19: #{tpu_custom_call.1} parent=1 // pred_check_branch
      %53 = sbr.rel (0) target = $region21
    $region20: #{tpu_custom_call.1} parent=1 // pred_region
      _
    $region21: #{tpu_custom_call.1} parent=1 // pred_fallthru
      _
    // Predicated region
    $region22: #{tpu_custom_call.1} parent=1 // pred_check
      _
    $region23: #{tpu_custom_call.1} parent=1 // pred_check_branch
      %55 = sbr.rel (0) target = $region25
    $region24: #{tpu_custom_call.1} parent=1 // pred_region
      %57 = dma.done [#allocation3], 256
    $region25: #{tpu_custom_call.1} parent=1 // pred_fallthru
      _
    // Predicated region
    $region26: #{tpu_custom_call.1} parent=1 // pred_check
      _
    $region27: #{tpu_custom_call.1} parent=1 // pred_check_branch
      %59 = sbr.rel (0) target = $region29
    $region28: #{tpu_custom_call.1} parent=1 // pred_region
      %61 = dma.done [#allocation6], 8192
    $region29: #{tpu_custom_call.1} parent=1 // pred_fallthru
      _
    // Predicated region
    $region30: #{tpu_custom_call.1} parent=1 // pred_check
      _
    $region31: #{tpu_custom_call.1} parent=1 // pred_check_branch
      %63 = sbr.rel (0) target = $region33
    $region32: #{tpu_custom_call.1} parent=1 // pred_region
      %65 = dma.done [#allocation6], 1024
    $region33: #{tpu_custom_call.1} parent=1 // pred_fallthru
      _
    %v66 = vld [vmem:[#allocation2] sm:$0xff]
    %v67 = vld [vmem:[#allocation2 + $0x8] sm:$0xff]
    %70 = vst [vmem:[#allocation1] ss:$4 sm:$0xff] %v66
    %s71 = scalar_lea.vmem [#allocation1], 32
    %72 = vst [vmem:[%s71] ss:$4 sm:$0xff] %v67
    %v73 = vld.sshfl [vmem:[#allocation1] sm:$0xff pattern:$0x73625140]
    %v74 = vld.sshfl [vmem:[#allocation1 + $0x8] sm:$0xff pattern:$0x73625140]
    %v75 = vld.sshfl [vmem:[#allocation1 + $0x10] sm:$0xff pattern:$0x73625140]
    %v76 = vld.sshfl [vmem:[#allocation1 + $0x18] sm:$0xff pattern:$0x73625140]
    %v77 = vld.sshfl [vmem:[#allocation1 + $0x20] sm:$0xff pattern:$0x73625140]
    %v78 = vld.sshfl [vmem:[#allocation1 + $0x28] sm:$0xff pattern:$0x73625140]
    %v79 = vld.sshfl [vmem:[#allocation1 + $0x30] sm:$0xff pattern:$0x73625140]
    %v80 = vld.sshfl [vmem:[#allocation1 + $0x38] sm:$0xff pattern:$0x73625140]
    %v89 = vpack.c.bf16 %v73, %v73
    %v90 = vpack.c.bf16 %v74, %v74
    %v91 = vpack.c.bf16 %v75, %v75
    %v92 = vpack.c.bf16 %v76, %v76
    %v93 = vpack.c.bf16 %v77, %v77
    %v94 = vpack.c.bf16 %v78, %v78
    %v95 = vpack.c.bf16 %v79, %v79
    %v96 = vpack.c.bf16 %v80, %v80
    %v97 = vld [vmem:[#allocation5] sm:$0xf]
    %v98 = vld [vmem:[#allocation5 + $0x4] sm:$0xf]
    %v99 = vld [vmem:[#allocation5 + $0x8] sm:$0xf]
    %v100 = vld [vmem:[#allocation5 + $0xc] sm:$0xf]
    %v101 = vld [vmem:[#allocation5 + $0x10] sm:$0xf]
    %v102 = vld [vmem:[#allocation5 + $0x14] sm:$0xf]
    %v103 = vld [vmem:[#allocation5 + $0x18] sm:$0xf]
    %v104 = vld [vmem:[#allocation5 + $0x1c] sm:$0xf]
    %v105 = vld [vmem:[#allocation5 + $0x20] sm:$0xf]
    %v106 = vld [vmem:[#allocation5 + $0x24] sm:$0xf]
    %v107 = vld [vmem:[#allocation5 + $0x28] sm:$0xf]
    %v108 = vld [vmem:[#allocation5 + $0x2c] sm:$0xf]
    %v109 = vld [vmem:[#allocation5 + $0x30] sm:$0xf]
    %v110 = vld [vmem:[#allocation5 + $0x34] sm:$0xf]
    %v111 = vld [vmem:[#allocation5 + $0x38] sm:$0xf]
    %v112 = vld [vmem:[#allocation5 + $0x3c] sm:$0xf]
    %v113 = vld [vmem:[#allocation5 + $0x40] sm:$0xf]
    %v114 = vld [vmem:[#allocation5 + $0x44] sm:$0xf]
    %v115 = vld [vmem:[#allocation5 + $0x48] sm:$0xf]
    %v116 = vld [vmem:[#allocation5 + $0x4c] sm:$0xf]
    %v117 = vld [vmem:[#allocation5 + $0x50] sm:$0xf]
    %v118 = vld [vmem:[#allocation5 + $0x54] sm:$0xf]
    %v119 = vld [vmem:[#allocation5 + $0x58] sm:$0xf]
    %v120 = vld [vmem:[#allocation5 + $0x5c] sm:$0xf]
    %v121 = vld [vmem:[#allocation5 + $0x60] sm:$0xf]
    %v122 = vld [vmem:[#allocation5 + $0x64] sm:$0xf]
    %v123 = vld [vmem:[#allocation5 + $0x68] sm:$0xf]
    %v124 = vld [vmem:[#allocation5 + $0x6c] sm:$0xf]
    %v125 = vld [vmem:[#allocation5 + $0x70] sm:$0xf]
    %v126 = vld [vmem:[#allocation5 + $0x74] sm:$0xf]
    %v127 = vld [vmem:[#allocation5 + $0x78] sm:$0xf]
    %v128 = vld [vmem:[#allocation5 + $0x7c] sm:$0xf]
    %v129 = vld [vmem:[#allocation5 + $0x80] sm:$0xf]
    %v130 = vld [vmem:[#allocation5 + $0x84] sm:$0xf]
    %v131 = vld [vmem:[#allocation5 + $0x88] sm:$0xf]
    %v132 = vld [vmem:[#allocation5 + $0x8c] sm:$0xf]
    %v133 = vld [vmem:[#allocation5 + $0x90] sm:$0xf]
    %v134 = vld [vmem:[#allocation5 + $0x94] sm:$0xf]
    %v135 = vld [vmem:[#allocation5 + $0x98] sm:$0xf]
    %v136 = vld [vmem:[#allocation5 + $0x9c] sm:$0xf]
    %v137 = vld [vmem:[#allocation5 + $0xa0] sm:$0xf]
    %v138 = vld [vmem:[#allocation5 + $0xa4] sm:$0xf]
    %v139 = vld [vmem:[#allocation5 + $0xa8] sm:$0xf]
    %v140 = vld [vmem:[#allocation5 + $0xac] sm:$0xf]
    %v141 = vld [vmem:[#allocation5 + $0xb0] sm:$0xf]
    %v142 = vld [vmem:[#allocation5 + $0xb4] sm:$0xf]
    %v143 = vld [vmem:[#allocation5 + $0xb8] sm:$0xf]
    %v144 = vld [vmem:[#allocation5 + $0xbc] sm:$0xf]
    %v145 = vld [vmem:[#allocation5 + $0xc0] sm:$0xf]
    %v146 = vld [vmem:[#allocation5 + $0xc4] sm:$0xf]
    %v147 = vld [vmem:[#allocation5 + $0xc8] sm:$0xf]
    %v148 = vld [vmem:[#allocation5 + $0xcc] sm:$0xf]
    %v149 = vld [vmem:[#allocation5 + $0xd0] sm:$0xf]
    %v150 = vld [vmem:[#allocation5 + $0xd4] sm:$0xf]
    %v151 = vld [vmem:[#allocation5 + $0xd8] sm:$0xf]
    %v152 = vld [vmem:[#allocation5 + $0xdc] sm:$0xf]
    %v153 = vld [vmem:[#allocation5 + $0xe0] sm:$0xf]
    %v154 = vld [vmem:[#allocation5 + $0xe4] sm:$0xf]
    %v155 = vld [vmem:[#allocation5 + $0xe8] sm:$0xf]
    %v156 = vld [vmem:[#allocation5 + $0xec] sm:$0xf]
    %v157 = vld [vmem:[#allocation5 + $0xf0] sm:$0xf]
    %v158 = vld [vmem:[#allocation5 + $0xf4] sm:$0xf]
    %v159 = vld [vmem:[#allocation5 + $0xf8] sm:$0xf]
    %v160 = vld [vmem:[#allocation5 + $0xfc] sm:$0xf]
    %v161 = vld [vmem:[#allocation5 + $0x100] sm:$0xf]
    %v162 = vld [vmem:[#allocation5 + $0x104] sm:$0xf]
    %v163 = vld [vmem:[#allocation5 + $0x108] sm:$0xf]
    %v164 = vld [vmem:[#allocation5 + $0x10c] sm:$0xf]
    %v165 = vld [vmem:[#allocation5 + $0x110] sm:$0xf]
    %v166 = vld [vmem:[#allocation5 + $0x114] sm:$0xf]
    %v167 = vld [vmem:[#allocation5 + $0x118] sm:$0xf]
    %v168 = vld [vmem:[#allocation5 + $0x11c] sm:$0xf]
    %v169 = vld [vmem:[#allocation5 + $0x120] sm:$0xf]
    %v170 = vld [vmem:[#allocation5 + $0x124] sm:$0xf]
    %v171 = vld [vmem:[#allocation5 + $0x128] sm:$0xf]
    %v172 = vld [vmem:[#allocation5 + $0x12c] sm:$0xf]
    %v173 = vld [vmem:[#allocation5 + $0x130] sm:$0xf]
    %v174 = vld [vmem:[#allocation5 + $0x134] sm:$0xf]
    %v175 = vld [vmem:[#allocation5 + $0x138] sm:$0xf]
    %v176 = vld [vmem:[#allocation5 + $0x13c] sm:$0xf]
    %v177 = vld [vmem:[#allocation5 + $0x140] sm:$0xf]
    %v178 = vld [vmem:[#allocation5 + $0x144] sm:$0xf]
    %v179 = vld [vmem:[#allocation5 + $0x148] sm:$0xf]
    %v180 = vld [vmem:[#allocation5 + $0x14c] sm:$0xf]
    %v181 = vld [vmem:[#allocation5 + $0x150] sm:$0xf]
    %v182 = vld [vmem:[#allocation5 + $0x154] sm:$0xf]
    %v183 = vld [vmem:[#allocation5 + $0x158] sm:$0xf]
    %v184 = vld [vmem:[#allocation5 + $0x15c] sm:$0xf]
    %v185 = vld [vmem:[#allocation5 + $0x160] sm:$0xf]
    %v186 = vld [vmem:[#allocation5 + $0x164] sm:$0xf]
    %v187 = vld [vmem:[#allocation5 + $0x168] sm:$0xf]
    %v188 = vld [vmem:[#allocation5 + $0x16c] sm:$0xf]
    %v189 = vld [vmem:[#allocation5 + $0x170] sm:$0xf]
    %v190 = vld [vmem:[#allocation5 + $0x174] sm:$0xf]
    %v191 = vld [vmem:[#allocation5 + $0x178] sm:$0xf]
    %v192 = vld [vmem:[#allocation5 + $0x17c] sm:$0xf]
    %v193 = vld [vmem:[#allocation5 + $0x180] sm:$0xf]
    %v194 = vld [vmem:[#allocation5 + $0x184] sm:$0xf]
    %v195 = vld [vmem:[#allocation5 + $0x188] sm:$0xf]
    %v196 = vld [vmem:[#allocation5 + $0x18c] sm:$0xf]
    %v197 = vld [vmem:[#allocation5 + $0x190] sm:$0xf]
    %v198 = vld [vmem:[#allocation5 + $0x194] sm:$0xf]
    %v199 = vld [vmem:[#allocation5 + $0x198] sm:$0xf]
    %v200 = vld [vmem:[#allocation5 + $0x19c] sm:$0xf]
    %v201 = vld [vmem:[#allocation5 + $0x1a0] sm:$0xf]
    %v202 = vld [vmem:[#allocation5 + $0x1a4] sm:$0xf]
    %v203 = vld [vmem:[#allocation5 + $0x1a8] sm:$0xf]
    %v204 = vld [vmem:[#allocation5 + $0x1ac] sm:$0xf]
    %v205 = vld [vmem:[#allocation5 + $0x1b0] sm:$0xf]
    %v206 = vld [vmem:[#allocation5 + $0x1b4] sm:$0xf]
    %v207 = vld [vmem:[#allocation5 + $0x1b8] sm:$0xf]
    %v208 = vld [vmem:[#allocation5 + $0x1bc] sm:$0xf]
    %v209 = vld [vmem:[#allocation5 + $0x1c0] sm:$0xf]
    %v210 = vld [vmem:[#allocation5 + $0x1c4] sm:$0xf]
    %v211 = vld [vmem:[#allocation5 + $0x1c8] sm:$0xf]
    %v212 = vld [vmem:[#allocation5 + $0x1cc] sm:$0xf]
    %v213 = vld [vmem:[#allocation5 + $0x1d0] sm:$0xf]
    %v214 = vld [vmem:[#allocation5 + $0x1d4] sm:$0xf]
    %v215 = vld [vmem:[#allocation5 + $0x1d8] sm:$0xf]
    %v216 = vld [vmem:[#allocation5 + $0x1dc] sm:$0xf]
    %v217 = vld [vmem:[#allocation5 + $0x1e0] sm:$0xf]
    %v218 = vld [vmem:[#allocation5 + $0x1e4] sm:$0xf]
    %v219 = vld [vmem:[#allocation5 + $0x1e8] sm:$0xf]
    %v220 = vld [vmem:[#allocation5 + $0x1ec] sm:$0xf]
    %v221 = vld [vmem:[#allocation5 + $0x1f0] sm:$0xf]
    %v222 = vld [vmem:[#allocation5 + $0x1f4] sm:$0xf]
    %v223 = vld [vmem:[#allocation5 + $0x1f8] sm:$0xf]
    %v224 = vld [vmem:[#allocation5 + $0x1fc] sm:$0xf]
    %v225 = vld [vmem:[%s2] sm:$0x1]
    %v227 = vperm.slane %v225, 0
    %v357 = vunpack.c.l.b16 %v97
    %v358 = vunpack.c.l.b16 %v98
    %v359 = vunpack.c.l.b16 %v99
    %v360 = vunpack.c.l.b16 %v100
    %v361 = vunpack.c.l.b16 %v101
    %v362 = vunpack.c.l.b16 %v102
    %v363 = vunpack.c.l.b16 %v103
    %v364 = vunpack.c.l.b16 %v104
    %v365 = vunpack.c.l.b16 %v105
    %v366 = vunpack.c.l.b16 %v106
    %v367 = vunpack.c.l.b16 %v107
    %v368 = vunpack.c.l.b16 %v108
    %v369 = vunpack.c.l.b16 %v109
    %v370 = vunpack.c.l.b16 %v110
    %v371 = vunpack.c.l.b16 %v111
    %v372 = vunpack.c.l.b16 %v112
    %v373 = vunpack.c.l.b16 %v113
    %v374 = vunpack.c.l.b16 %v114
    %v375 = vunpack.c.l.b16 %v115
    %v376 = vunpack.c.l.b16 %v116
    %v377 = vunpack.c.l.b16 %v117
    %v378 = vunpack.c.l.b16 %v118
    %v379 = vunpack.c.l.b16 %v119
    %v380 = vunpack.c.l.b16 %v120
    %v381 = vunpack.c.l.b16 %v121
    %v382 = vunpack.c.l.b16 %v122
    %v383 = vunpack.c.l.b16 %v123
    %v384 = vunpack.c.l.b16 %v124
    %v385 = vunpack.c.l.b16 %v125
    %v386 = vunpack.c.l.b16 %v126
    %v387 = vunpack.c.l.b16 %v127
    %v388 = vunpack.c.l.b16 %v128
    %v389 = vunpack.c.l.b16 %v129
    %v390 = vunpack.c.l.b16 %v130
    %v391 = vunpack.c.l.b16 %v131
    %v392 = vunpack.c.l.b16 %v132
    %v393 = vunpack.c.l.b16 %v133
    %v394 = vunpack.c.l.b16 %v134
    %v395 = vunpack.c.l.b16 %v135
    %v396 = vunpack.c.l.b16 %v136
    %v397 = vunpack.c.l.b16 %v137
    %v398 = vunpack.c.l.b16 %v138
    %v399 = vunpack.c.l.b16 %v139
    %v400 = vunpack.c.l.b16 %v140
    %v401 = vunpack.c.l.b16 %v141
    %v402 = vunpack.c.l.b16 %v142
    %v403 = vunpack.c.l.b16 %v143
    %v404 = vunpack.c.l.b16 %v144
    %v405 = vunpack.c.l.b16 %v145
    %v406 = vunpack.c.l.b16 %v146
    %v407 = vunpack.c.l.b16 %v147
    %v408 = vunpack.c.l.b16 %v148
    %v409 = vunpack.c.l.b16 %v149
    %v410 = vunpack.c.l.b16 %v150
    %v411 = vunpack.c.l.b16 %v151
    %v412 = vunpack.c.l.b16 %v152
    %v413 = vunpack.c.l.b16 %v153
    %v414 = vunpack.c.l.b16 %v154
    %v415 = vunpack.c.l.b16 %v155
    %v416 = vunpack.c.l.b16 %v156
    %v417 = vunpack.c.l.b16 %v157
    %v418 = vunpack.c.l.b16 %v158
    %v419 = vunpack.c.l.b16 %v159
    %v420 = vunpack.c.l.b16 %v160
    %v421 = vunpack.c.l.b16 %v161
    %v422 = vunpack.c.l.b16 %v162
    %v423 = vunpack.c.l.b16 %v163
    %v424 = vunpack.c.l.b16 %v164
    %v425 = vunpack.c.l.b16 %v165
    %v426 = vunpack.c.l.b16 %v166
    %v427 = vunpack.c.l.b16 %v167
    %v428 = vunpack.c.l.b16 %v168
    %v429 = vunpack.c.l.b16 %v169
    %v430 = vunpack.c.l.b16 %v170
    %v431 = vunpack.c.l.b16 %v171
    %v432 = vunpack.c.l.b16 %v172
    %v433 = vunpack.c.l.b16 %v173
    %v434 = vunpack.c.l.b16 %v174
    %v435 = vunpack.c.l.b16 %v175
    %v436 = vunpack.c.l.b16 %v176
    %v437 = vunpack.c.l.b16 %v177
    %v438 = vunpack.c.l.b16 %v178
    %v439 = vunpack.c.l.b16 %v179
    %v440 = vunpack.c.l.b16 %v180
    %v441 = vunpack.c.l.b16 %v181
    %v442 = vunpack.c.l.b16 %v182
    %v443 = vunpack.c.l.b16 %v183
    %v444 = vunpack.c.l.b16 %v184
    %v445 = vunpack.c.l.b16 %v185
    %v446 = vunpack.c.l.b16 %v186
    %v447 = vunpack.c.l.b16 %v187
    %v448 = vunpack.c.l.b16 %v188
    %v449 = vunpack.c.l.b16 %v189
    %v450 = vunpack.c.l.b16 %v190
    %v451 = vunpack.c.l.b16 %v191
    %v452 = vunpack.c.l.b16 %v192
    %v453 = vunpack.c.l.b16 %v193
    %v454 = vunpack.c.l.b16 %v194
    %v455 = vunpack.c.l.b16 %v195
    %v456 = vunpack.c.l.b16 %v196
    %v457 = vunpack.c.l.b16 %v197
    %v458 = vunpack.c.l.b16 %v198
    %v459 = vunpack.c.l.b16 %v199
    %v460 = vunpack.c.l.b16 %v200
    %v461 = vunpack.c.l.b16 %v201
    %v462 = vunpack.c.l.b16 %v202
    %v463 = vunpack.c.l.b16 %v203
    %v464 = vunpack.c.l.b16 %v204
    %v465 = vunpack.c.l.b16 %v205
    %v466 = vunpack.c.l.b16 %v206
    %v467 = vunpack.c.l.b16 %v207
    %v468 = vunpack.c.l.b16 %v208
    %v469 = vunpack.c.l.b16 %v209
    %v470 = vunpack.c.l.b16 %v210
    %v471 = vunpack.c.l.b16 %v211
    %v472 = vunpack.c.l.b16 %v212
    %v473 = vunpack.c.l.b16 %v213
    %v474 = vunpack.c.l.b16 %v214
    %v475 = vunpack.c.l.b16 %v215
    %v476 = vunpack.c.l.b16 %v216
    %v477 = vunpack.c.l.b16 %v217
    %v478 = vunpack.c.l.b16 %v218
    %v479 = vunpack.c.l.b16 %v219
    %v480 = vunpack.c.l.b16 %v220
    %v481 = vunpack.c.l.b16 %v221
    %v482 = vunpack.c.l.b16 %v222
    %v483 = vunpack.c.l.b16 %v223
    %v484 = vunpack.c.l.b16 %v224
    %v485 = vpack.c.b16 %v358, %v357
    %v486 = vpack.c.b16 %v360, %v359
    %v487 = vpack.c.b16 %v362, %v361
    %v488 = vpack.c.b16 %v364, %v363
    %v489 = vpack.c.b16 %v366, %v365
    %v490 = vpack.c.b16 %v368, %v367
    %v491 = vpack.c.b16 %v370, %v369
    %v492 = vpack.c.b16 %v372, %v371
    %v493 = vpack.c.b16 %v374, %v373
    %v494 = vpack.c.b16 %v376, %v375
    %v495 = vpack.c.b16 %v378, %v377
    %v496 = vpack.c.b16 %v380, %v379
    %v497 = vpack.c.b16 %v382, %v381
    %v498 = vpack.c.b16 %v384, %v383
    %v499 = vpack.c.b16 %v386, %v385
    %v500 = vpack.c.b16 %v388, %v387
    %v501 = vpack.c.b16 %v390, %v389
    %v502 = vpack.c.b16 %v392, %v391
    %v503 = vpack.c.b16 %v394, %v393
    %v504 = vpack.c.b16 %v396, %v395
    %v505 = vpack.c.b16 %v398, %v397
    %v506 = vpack.c.b16 %v400, %v399
    %v507 = vpack.c.b16 %v402, %v401
    %v508 = vpack.c.b16 %v404, %v403
    %v509 = vpack.c.b16 %v406, %v405
    %v510 = vpack.c.b16 %v408, %v407
    %v511 = vpack.c.b16 %v410, %v409
    %v512 = vpack.c.b16 %v412, %v411
    %v513 = vpack.c.b16 %v414, %v413
    %v514 = vpack.c.b16 %v416, %v415
    %v515 = vpack.c.b16 %v418, %v417
    %v516 = vpack.c.b16 %v420, %v419
    %v517 = vpack.c.b16 %v422, %v421
    %v518 = vpack.c.b16 %v424, %v423
    %v519 = vpack.c.b16 %v426, %v425
    %v520 = vpack.c.b16 %v428, %v427
    %v521 = vpack.c.b16 %v430, %v429
    %v522 = vpack.c.b16 %v432, %v431
    %v523 = vpack.c.b16 %v434, %v433
    %v524 = vpack.c.b16 %v436, %v435
    %v525 = vpack.c.b16 %v438, %v437
    %v526 = vpack.c.b16 %v440, %v439
    %v527 = vpack.c.b16 %v442, %v441
    %v528 = vpack.c.b16 %v444, %v443
    %v529 = vpack.c.b16 %v446, %v445
    %v530 = vpack.c.b16 %v448, %v447
    %v531 = vpack.c.b16 %v450, %v449
    %v532 = vpack.c.b16 %v452, %v451
    %v533 = vpack.c.b16 %v454, %v453
    %v534 = vpack.c.b16 %v456, %v455
    %v535 = vpack.c.b16 %v458, %v457
    %v536 = vpack.c.b16 %v460, %v459
    %v537 = vpack.c.b16 %v462, %v461
    %v538 = vpack.c.b16 %v464, %v463
    %v539 = vpack.c.b16 %v466, %v465
    %v540 = vpack.c.b16 %v468, %v467
    %v541 = vpack.c.b16 %v470, %v469
    %v542 = vpack.c.b16 %v472, %v471
    %v543 = vpack.c.b16 %v474, %v473
    %v544 = vpack.c.b16 %v476, %v475
    %v545 = vpack.c.b16 %v478, %v477
    %v546 = vpack.c.b16 %v480, %v479
    %v547 = vpack.c.b16 %v482, %v481
    %v548 = vpack.c.b16 %v484, %v483
    %613 = vmatpush.bf16.msra.mxu0 %v492
    %614 = vmatpush.bf16.msra.mxu0 %v491
    %615 = vmatpush.bf16.msra.mxu0 %v490
    %616 = vmatpush.bf16.msra.mxu0 %v489
    %617 = vmatpush.bf16.msra.mxu0 %v488
    %618 = vmatpush.bf16.msra.mxu0 %v487
    %619 = vmatpush.bf16.msra.mxu0 %v486
    %620 = vmatpush.bf16.msra.mxu0 %v485
    %621 = vmatmul.bf16.gmra.mxu0 %v89
    %v622 = vpop.f32.mrf.mxu0
    %v623 = vadd.f32 %v227, %v622
    %v624 = vpop.f32.mrf.mxu0
    %625 = vdwg.mxu0
    %626 = vmatpush.bf16.msra.mxu0 %v500
    %627 = vmatpush.bf16.msra.mxu0 %v499
    %628 = vmatpush.bf16.msra.mxu0 %v498
    %629 = vmatpush.bf16.msra.mxu0 %v497
    %630 = vmatpush.bf16.msra.mxu0 %v496
    %631 = vmatpush.bf16.msra.mxu0 %v495
    %632 = vmatpush.bf16.msra.mxu0 %v494
    %633 = vmatpush.bf16.msra.mxu0 %v493
    %634 = vmatmul.bf16.gmra.mxu0 %v90
    %v635 = vpop.f32.mrf.mxu0
    %v636 = vadd.f32 %v623, %v635
    %v637 = vpop.f32.mrf.mxu0
    %638 = vdwg.mxu0
    %639 = vmatpush.bf16.msra.mxu0 %v508
    %640 = vmatpush.bf16.msra.mxu0 %v507
    %641 = vmatpush.bf16.msra.mxu0 %v506
    %642 = vmatpush.bf16.msra.mxu0 %v505
    %643 = vmatpush.bf16.msra.mxu0 %v504
    %644 = vmatpush.bf16.msra.mxu0 %v503
    %645 = vmatpush.bf16.msra.mxu0 %v502
    %646 = vmatpush.bf16.msra.mxu0 %v501
    %647 = vmatmul.bf16.gmra.mxu0 %v91
    %v648 = vpop.f32.mrf.mxu0
    %v649 = vadd.f32 %v636, %v648
    %v650 = vpop.f32.mrf.mxu0
    %651 = vdwg.mxu0
    %652 = vmatpush.bf16.msra.mxu0 %v516
    %653 = vmatpush.bf16.msra.mxu0 %v515
    %654 = vmatpush.bf16.msra.mxu0 %v514
    %655 = vmatpush.bf16.msra.mxu0 %v513
    %656 = vmatpush.bf16.msra.mxu0 %v512
    %657 = vmatpush.bf16.msra.mxu0 %v511
    %658 = vmatpush.bf16.msra.mxu0 %v510
    %659 = vmatpush.bf16.msra.mxu0 %v509
    %660 = vmatmul.bf16.gmra.mxu0 %v92
    %v661 = vpop.f32.mrf.mxu0
    %v662 = vadd.f32 %v649, %v661
    %v663 = vpop.f32.mrf.mxu0
    %664 = vdwg.mxu0
    %665 = vmatpush.bf16.msra.mxu0 %v524
    %666 = vmatpush.bf16.msra.mxu0 %v523
    %667 = vmatpush.bf16.msra.mxu0 %v522
    %668 = vmatpush.bf16.msra.mxu0 %v521
    %669 = vmatpush.bf16.msra.mxu0 %v520
    %670 = vmatpush.bf16.msra.mxu0 %v519
    %671 = vmatpush.bf16.msra.mxu0 %v518
    %672 = vmatpush.bf16.msra.mxu0 %v517
    %673 = vmatmul.bf16.gmra.mxu0 %v93
    %v674 = vpop.f32.mrf.mxu0
    %v675 = vadd.f32 %v662, %v674
    %v676 = vpop.f32.mrf.mxu0
    %677 = vdwg.mxu0
    %678 = vmatpush.bf16.msra.mxu0 %v532
    %679 = vmatpush.bf16.msra.mxu0 %v531
    %680 = vmatpush.bf16.msra.mxu0 %v530
    %681 = vmatpush.bf16.msra.mxu0 %v529
    %682 = vmatpush.bf16.msra.mxu0 %v528
    %683 = vmatpush.bf16.msra.mxu0 %v527
    %684 = vmatpush.bf16.msra.mxu0 %v526
    %685 = vmatpush.bf16.msra.mxu0 %v525
    %686 = vmatmul.bf16.gmra.mxu0 %v94
    %v687 = vpop.f32.mrf.mxu0
    %v688 = vadd.f32 %v675, %v687
    %v689 = vpop.f32.mrf.mxu0
    %690 = vdwg.mxu0
    %691 = vmatpush.bf16.msra.mxu0 %v540
    %692 = vmatpush.bf16.msra.mxu0 %v539
    %693 = vmatpush.bf16.msra.mxu0 %v538
    %694 = vmatpush.bf16.msra.mxu0 %v537
    %695 = vmatpush.bf16.msra.mxu0 %v536
    %696 = vmatpush.bf16.msra.mxu0 %v535
    %697 = vmatpush.bf16.msra.mxu0 %v534
    %698 = vmatpush.bf16.msra.mxu0 %v533
    %699 = vmatmul.bf16.gmra.mxu0 %v95
    %v700 = vpop.f32.mrf.mxu0
    %v701 = vadd.f32 %v688, %v700
    %v702 = vpop.f32.mrf.mxu0
    %703 = vdwg.mxu0
    %704 = vmatpush.bf16.msra.mxu0 %v548
    %705 = vmatpush.bf16.msra.mxu0 %v547
    %706 = vmatpush.bf16.msra.mxu0 %v546
    %707 = vmatpush.bf16.msra.mxu0 %v545
    %708 = vmatpush.bf16.msra.mxu0 %v544
    %709 = vmatpush.bf16.msra.mxu0 %v543
    %710 = vmatpush.bf16.msra.mxu0 %v542
    %711 = vmatpush.bf16.msra.mxu0 %v541
    %712 = vmatmul.bf16.gmra.mxu0 %v96
    %v713 = vpop.f32.mrf.mxu0
    %v714 = vadd.f32 %v701, %v713
    %v715 = vpop.f32.mrf.mxu0
    %716 = vdwg.mxu0
    %v717 = vmax.f32 %v714, 0.0
    %v718 = vpack.c.bf16 %v717, %v717
    %v719 = vld [vmem:[#allocation7] sm:$0xf]
    %v720 = vld [vmem:[#allocation7 + $0x4] sm:$0xf]
    %v721 = vld [vmem:[#allocation7 + $0x8] sm:$0xf]
    %v722 = vld [vmem:[#allocation7 + $0xc] sm:$0xf]
    %v723 = vld [vmem:[#allocation7 + $0x10] sm:$0xf]
    %v724 = vld [vmem:[#allocation7 + $0x14] sm:$0xf]
    %v725 = vld [vmem:[#allocation7 + $0x18] sm:$0xf]
    %v726 = vld [vmem:[#allocation7 + $0x1c] sm:$0xf]
    %v727 = vld [vmem:[#allocation7 + $0x20] sm:$0xf]
    %v728 = vld [vmem:[#allocation7 + $0x24] sm:$0xf]
    %v729 = vld [vmem:[#allocation7 + $0x28] sm:$0xf]
    %v730 = vld [vmem:[#allocation7 + $0x2c] sm:$0xf]
    %v731 = vld [vmem:[#allocation7 + $0x30] sm:$0xf]
    %v732 = vld [vmem:[#allocation7 + $0x34] sm:$0xf]
    %v733 = vld [vmem:[#allocation7 + $0x38] sm:$0xf]
    %v734 = vld [vmem:[#allocation7 + $0x3c] sm:$0xf]
    %v735 = vld [vmem:[%s4] sm:$0x1]
    %v737 = vperm.slane %v735, 0
    %v755 = vunpack.c.l.b16 %v719
    %v756 = vunpack.c.l.b16 %v720
    %v757 = vunpack.c.l.b16 %v721
    %v758 = vunpack.c.l.b16 %v722
    %v759 = vunpack.c.l.b16 %v723
    %v760 = vunpack.c.l.b16 %v724
    %v761 = vunpack.c.l.b16 %v725
    %v762 = vunpack.c.l.b16 %v726
    %v763 = vunpack.c.l.b16 %v727
    %v764 = vunpack.c.l.b16 %v728
    %v765 = vunpack.c.l.b16 %v729
    %v766 = vunpack.c.l.b16 %v730
    %v767 = vunpack.c.l.b16 %v731
    %v768 = vunpack.c.l.b16 %v732
    %v769 = vunpack.c.l.b16 %v733
    %v770 = vunpack.c.l.b16 %v734
    %v771 = vpack.c.b16 %v756, %v755
    %v772 = vpack.c.b16 %v758, %v757
    %v773 = vpack.c.b16 %v760, %v759
    %v774 = vpack.c.b16 %v762, %v761
    %v775 = vpack.c.b16 %v764, %v763
    %v776 = vpack.c.b16 %v766, %v765
    %v777 = vpack.c.b16 %v768, %v767
    %v778 = vpack.c.b16 %v770, %v769
    %787 = vmatpush.bf16.msra.mxu0 %v778
    %788 = vmatpush.bf16.msra.mxu0 %v777
    %789 = vmatpush.bf16.msra.mxu0 %v776
    %790 = vmatpush.bf16.msra.mxu0 %v775
    %791 = vmatpush.bf16.msra.mxu0 %v774
    %792 = vmatpush.bf16.msra.mxu0 %v773
    %793 = vmatpush.bf16.msra.mxu0 %v772
    %794 = vmatpush.bf16.msra.mxu0 %v771
    %795 = vmatmul.bf16.gmra.mxu0 %v718
    %v796 = vpop.f32.mrf.mxu0
    %v797 = vadd.f32 %v737, %v796
    %v798 = vpop.f32.mrf.mxu0
    %799 = vdwg.mxu0
    %v800 = vsub.f32 0.0, %v797
    %v801 = vmul.f32 %v800, 1.442695
    %v802 = vpow.pop %v801
    %v803 = vadd.f32 %v802, 1.0
    %v804 = vrcp.pop %v803
    %v805 = vmul.f32 %v803, %v804
    %v806 = vsub.f32 1.0, %v805
    %v807 = vmul.f32 %v804, %v806
    %v808 = vadd.f32 %v804, %v807
    %vm809 = vweird.f32 %v803
    %vm810 = vweird.f32 %v804
    %vm811 = vmor %vm809, %vm810
    %v812 = vsel %vm811, %v804, %v808
    %v813 = vand.u32 2147483647, %v803
    %vm814 = vcmp.eq.f32.partialorder %v813, 8.507059e+37
    %v815 = vand.u32 %v803, 2147483648
    %v816 = vor.u32 1.1754944e-38, %v815
    %v817 = vsel %vm814, %v816, %v812
    %v818 = vmul.f32 1.0, %v817
    %819 = vst [vmem:[#allocation8] sm:$0x3] %v818
    // Predicated region
    $region34: #{tpu_custom_call.1} parent=1 // pred_check
      _
    $region35: #{tpu_custom_call.1} parent=1 // pred_check_branch
      %821 = sbr.rel (0) target = $region37
    $region36: #{tpu_custom_call.1} parent=1 // pred_region
      %823 = vsyncadd [#allocation4], 0
      %s825 = sshll.u32 [#allocation8], 4
      %s826 = int_to_ptr.vmem [resolvable:$true] %s825
      %s827 = sshll.u32 %s5, 4
      %s828 = int_to_ptr.hbm [resolvable:$true] %s827
      %830 = dma.vmem_to_hbm [thread:$0]  %s826, 32, %s828, [#allocation4]
    $region37: #{tpu_custom_call.1} parent=1 // pred_fallthru
      _
    // Predicated region
    $region38: #{tpu_custom_call.1} parent=1 // pred_check
      _
    $region39: #{tpu_custom_call.1} parent=1 // pred_check_branch
      %832 = sbr.rel (0) target = $region41
    $region40: #{tpu_custom_call.1} parent=1 // pred_region
      %834 = dma.done [#allocation4], 32
    $region41: #{tpu_custom_call.1} parent=1 // pred_fallthru
      _
    %835 = vsyncpa [#allocation3], 1
    %836 = vsyncpa [#allocation6], 1
    %837 = vsyncpa [#allocation4], 1

</llo_original>
